<compile_context>
chip_gen: v7x
topology: tpu7x:2x2x1
jax: 0.10.0
libtpu: 0.0.40
codegen_flags: <defaults>
</compile_context>

<pallas_src>
import jax
import jax.numpy as jnp
from jax.experimental import pallas as pl
from jax.experimental.pallas import tpu as pltpu

BN_EPS = 1e-5
PAD = 128   # lane width every feature dim is padded to
HID = 64    # hidden width of the common MLP (real, unpadded)

# ---------------------------------------------------------------------------
# Model configuration (small, synthetic).
#   lats dim = 32, acts dim = 8  -> concat input dim = 40
#   common_head_layers    = [40, 64, 64]   (2 Linear+ReLU+BN layers)
#   lats_diff_head_layers = [64, 32]       (1 Linear+ReLU+BN layer)
#   reward_head_layers    = [64, 1]        (1 Linear+ReLU+BN layer)
# ---------------------------------------------------------------------------
LAT_DIM = 32
ACT_DIM = 8
COMMON_LAYERS = [ACT_DIM + LAT_DIM, HID, HID]
LATS_DIFF_LAYERS = [HID, LAT_DIM]
REWARD_LAYERS = [HID, 1]

# Packed-parameter row layout (all rows are 128 lanes wide, f32).
R_W0A = 0                       # (ACT_DIM, 128) first-layer weight, acts part
R_W0L = R_W0A + ACT_DIM         # (LAT_DIM, 128) first-layer weight, lats part
R_W1 = R_W0L + LAT_DIM          # (HID, 128)     second common layer weight
R_WH = R_W1 + HID               # (HID, 128)     fused lats_diff|reward head weight
R_VEC = R_WH + HID              # 9 rows: b0,g0,be0, b1,g1,be1, bH,gH,beH
N_VECS = 9
TOTAL_ROWS = ((R_VEC + N_VECS + 7) // 8) * 8   # 184 rows -> ~94 KB blob


def _relu_bn(h_pre, gamma, beta):
    """ReLU -> BatchNorm1d (training-mode batch stats, biased var), affine folded."""
    h = jnp.maximum(h_pre, 0.0)
    mean = jnp.mean(h, axis=0, keepdims=True)
    centered = h - mean
    var = jnp.mean(centered * centered, axis=0, keepdims=True)
    inv_std = 1.0 / jnp.sqrt(var + BN_EPS)        # exact, matches the reference
    return centered * (gamma * inv_std) + beta


def dyn_model_kernel(acts_ref, lats_ref, p_ref, out_ref):
    # acts_ref: (B, ACT_DIM)   lats_ref: (B, LAT_DIM)   (leading T dim squeezed)
    acts = acts_ref[...]
    lats = lats_ref[...]

    w0a = p_ref[R_W0A:R_W0A + ACT_DIM, :]
    w0l = p_ref[R_W0L:R_W0L + LAT_DIM, :]
    w1 = p_ref[R_W1:R_W1 + HID, :]
    wh = p_ref[R_WH:R_WH + HID, :]

    # Hoist all nine (1,128) bias/gamma/beta rows once before the matmul chain.
    b0, g0, be0, b1, g1, be1, bh, gh, beh = (
        p_ref[R_VEC + i:R_VEC + i + 1, :] for i in range(N_VECS))

    # common layer 0 (split-input linear replaces the wrapper concat)
    h = (jnp.dot(acts, w0a, preferred_element_type=jnp.float32)
         + jnp.dot(lats, w0l, preferred_element_type=jnp.float32)
         + b0)
    h = _relu_bn(h, g0, be0)

    # common layer 1 — contract only the 64 real lanes (padded lanes are exactly 0)
    h = jnp.dot(h[:, :HID], w1, preferred_element_type=jnp.float32) + b1
    h = _relu_bn(h, g1, be1)

    # fused lats_diff | reward head (cols 0:32 = lats_diff, col 32 = reward)
    h = jnp.dot(h[:, :HID], wh, preferred_element_type=jnp.float32) + bh
    h = _relu_bn(h, gh, beh)

    out_ref[...] = h.astype(out_ref.dtype)


# ---------------------------------------------------------------------------
# Parameter init (raw, PyTorch-like) and packing into the single VMEM blob.
# ---------------------------------------------------------------------------
def init_params(key):
    def make_head(key, dims):
        head = []
        for in_dim, out_dim in zip(dims[:-1], dims[1:]):
            key, kw, kb, kg, kbe = jax.random.split(key, 5)
            bound = 1.0 / jnp.sqrt(in_dim)
            w = jax.random.uniform(kw, (in_dim, out_dim), jnp.float32, -bound, bound)
            b = jax.random.uniform(kb, (1, out_dim), jnp.float32, -bound, bound)
            gamma = 1.0 + 0.1 * jax.random.normal(kg, (1, out_dim), jnp.float32)
            beta = 0.1 * jax.random.normal(kbe, (1, out_dim), jnp.float32)
            head.extend([w, b, gamma, beta])
        return key, head

    key, common = make_head(key, COMMON_LAYERS)
    key, lats_diff = make_head(key, LATS_DIFF_LAYERS)
    key, reward = make_head(key, REWARD_LAYERS)
    return common + lats_diff + reward


def pack_params(params):
    (cw0, cb0, cg0, cbe0,
     cw1, cb1, cg1, cbe1,
     lw0, lb0, lg0, lbe0,
     rw0, rb0, rg0, rbe0) = params

    def pad_cols(a):
        return jnp.pad(a, ((0, 0), (0, PAD - a.shape[1])))

    w0a = pad_cols(cw0[:ACT_DIM])                        # (8, 128)
    w0l = pad_cols(cw0[ACT_DIM:])                        # (32, 128)
    w1 = pad_cols(cw1)                                   # (64, 128)  no zero rows
    wh = pad_cols(jnp.concatenate([lw0, rw0], axis=1))   # (64, 128)  fused heads

    bh = jnp.concatenate([lb0, rb0], axis=1)
    gh = jnp.concatenate([lg0, rg0], axis=1)
    beh = jnp.concatenate([lbe0, rbe0], axis=1)
    vecs = jnp.concatenate(
        [pad_cols(v) for v in (cb0, cg0, cbe0, cb1, cg1, cbe1, bh, gh, beh)], axis=0)

    blob = jnp.concatenate([w0a, w0l, w1, wh, vecs], axis=0)          # (177, 128)
    blob = jnp.pad(blob, ((0, TOTAL_ROWS - blob.shape[0]), (0, 0)))   # (184, 128)
    return blob


# ---------------------------------------------------------------------------
# Forward wrappers.
# ---------------------------------------------------------------------------
@jax.jit
def dyn_model_forward_rollout(lats, acts, packed_params):
    """T stacked forwards in ONE pallas_call.

    lats: (T, B, LAT_DIM), acts: (T, B, ACT_DIM).
    The param blob's index_map always returns block (0, 0) so it is DMA'd once and
    stays VMEM-resident across all T grid steps; each step is an independent forward
    (per-timestep BN batch stats), so the T axis is safely "parallel".
    """
    T, B, _ = lats.shape
    out = pl.pallas_call(
        dyn_model_kernel,
        out_shape=jax.ShapeDtypeStruct((T, B, PAD), jnp.float32),
        grid=(T,),
        in_specs=[
            pl.BlockSpec((None, B, ACT_DIM), lambda t: (t, 0, 0)),
            pl.BlockSpec((None, B, LAT_DIM), lambda t: (t, 0, 0)),
            pl.BlockSpec((TOTAL_ROWS, PAD), lambda t: (0, 0)),   # params stay resident
        ],
        out_specs=pl.BlockSpec((None, B, PAD), lambda t: (t, 0, 0)),
        compiler_params=pltpu.CompilerParams(
            dimension_semantics=("parallel",),
            vmem_limit_bytes=32 * 1024 * 1024,   # sized for v7x's smaller VMEM too
        ),
    )(acts.astype(jnp.float32), lats.astype(jnp.float32), packed_params)

    lats_diffs = out[:, :, :LAT_DIM]
    rewards = out[:, :, LAT_DIM:LAT_DIM + 1]
    return lats_diffs, rewards


@jax.jit
def dyn_model_forward(lats, acts, packed_params):
    """Single forward, matching the PyTorch module signature (lats, acts) -> (ld, rw)."""
    ld, rw = dyn_model_forward_rollout(lats[None], acts[None], packed_params)
    return ld[0], rw[0]


def reference_forward(lats, acts, params):
    """Pure-JAX reference (matches PyTorch training-mode BN)."""
    x = jnp.concatenate([acts, lats], axis=-1).astype(jnp.float32)

    def layer(h, w, b, g, be):
        h = h @ w + b
        h = jnp.maximum(h, 0.0)
        m = jnp.mean(h, axis=0, keepdims=True)
        v = jnp.mean((h - m) ** 2, axis=0, keepdims=True)
        return (h - m) / jnp.sqrt(v + BN_EPS) * g + be

    idx = 0

    def run_head(h, n_layers):
        nonlocal idx
        for _ in range(n_layers):
            w, b, g, be = params[idx:idx + 4]
            idx += 4
            h = layer(h, w, b, g, be)
        return h

    h = run_head(x, len(COMMON_LAYERS) - 1)
    ld = run_head(h, len(LATS_DIFF_LAYERS) - 1)
    rw = run_head(h, len(REWARD_LAYERS) - 1)
    return ld, rw


if __name__ == "__main__":
    key = jax.random.PRNGKey(0)
    k_params, k_lats, k_acts = jax.random.split(key, 3)

    T, batch = 4, 8
    lats = jax.random.normal(k_lats, (T, batch, LAT_DIM), jnp.float32)
    acts = jax.random.normal(k_acts, (T, batch, ACT_DIM), jnp.float32)

    params = init_params(k_params)
    packed = pack_params(params)

    # Single forward (module semantics).
    ld1, rw1 = dyn_model_forward(lats[0], acts[0], packed)
    jax.block_until_ready((ld1, rw1))
    assert ld1.shape == (batch, LAT_DIM)
    assert rw1.shape == (batch, 1)
    ref_ld0, ref_rw0 = reference_forward(lats[0], acts[0], params)
    assert jnp.allclose(ld1, ref_ld0, atol=1e-4, rtol=1e-4)
    assert jnp.allclose(rw1, ref_rw0, atol=1e-4, rtol=1e-4)

    # Rollout: T independent forwards amortized over one pallas_call.
    ldT, rwT = dyn_model_forward_rollout(lats, acts, packed)
    jax.block_until_ready((ldT, rwT))
    assert ldT.shape == (T, batch, LAT_DIM)
    assert rwT.shape == (T, batch, 1)
    for t in range(T):
        ref_ld, ref_rw = reference_forward(lats[t], acts[t], params)
        assert jnp.allclose(ldT[t], ref_ld, atol=1e-4, rtol=1e-4)
        assert jnp.allclose(rwT[t], ref_rw, atol=1e-4, rtol=1e-4)

    print("KERNEL_OK")
</pallas_src>

<mosaic_0001>
module attributes {stable_mosaic.version = 11 : i64} {
  func.func @dyn_model_kernel(%arg0: i32, %arg1: memref<1x8x8xf32, #tpu.memory_space<vmem>>, %arg2: memref<1x8x32xf32, #tpu.memory_space<vmem>>, %arg3: memref<184x128xf32, #tpu.memory_space<vmem>>, %arg4: memref<1x8x128xf32, #tpu.memory_space<vmem>>) attributes {dimension_semantics = [#tpu.dimension_semantics<parallel>], iteration_bounds = array<i64: 1>, scalar_prefetch = 0 : i64, scratch_operands = 0 : i64, tpu.core_type = #tpu.core_type<tc>, window_params = [{transform_indices = @transform_0, window_bounds = array<i64: 1, 8, 8>}, {transform_indices = @transform_1, window_bounds = array<i64: 1, 8, 32>}, {pipeline_mode = #tpu.pipeline_mode<synchronous>, transform_indices = @transform_2, window_bounds = array<i64: 184, 128>}, {transform_indices = @transform_3, window_bounds = array<i64: 1, 8, 128>}]} {
    %c0 = arith.constant 0 : index
    %c0_0 = arith.constant 0 : index
    %c0_1 = arith.constant 0 : index
    %0 = vector.load %arg1[%c0, %c0_0, %c0_1] : memref<1x8x8xf32, #tpu.memory_space<vmem>>, vector<1x8x8xf32>
    %1 = vector.shape_cast %0 : vector<1x8x8xf32> to vector<8x8xf32>
    %c0_2 = arith.constant 0 : index
    %c0_3 = arith.constant 0 : index
    %c0_4 = arith.constant 0 : index
    %2 = vector.load %arg2[%c0_2, %c0_3, %c0_4] : memref<1x8x32xf32, #tpu.memory_space<vmem>>, vector<1x8x32xf32>
    %3 = vector.shape_cast %2 : vector<1x8x32xf32> to vector<8x32xf32>
    %c0_5 = arith.constant 0 : index
    %c0_6 = arith.constant 0 : index
    %4 = vector.load %arg3[%c0_5, %c0_6] : memref<184x128xf32, #tpu.memory_space<vmem>>, vector<8x128xf32>
    %c8 = arith.constant 8 : index
    %c0_7 = arith.constant 0 : index
    %5 = vector.load %arg3[%c8, %c0_7] : memref<184x128xf32, #tpu.memory_space<vmem>>, vector<32x128xf32>
    %c40 = arith.constant 40 : index
    %c0_8 = arith.constant 0 : index
    %6 = vector.load %arg3[%c40, %c0_8] : memref<184x128xf32, #tpu.memory_space<vmem>>, vector<64x128xf32>
    %c104 = arith.constant 104 : index
    %c0_9 = arith.constant 0 : index
    %7 = vector.load %arg3[%c104, %c0_9] : memref<184x128xf32, #tpu.memory_space<vmem>>, vector<64x128xf32>
    %c168 = arith.constant 168 : index
    %c0_10 = arith.constant 0 : index
    %8 = vector.load %arg3[%c168, %c0_10] : memref<184x128xf32, #tpu.memory_space<vmem>>, vector<1x128xf32>
    %c169 = arith.constant 169 : index
    %c0_11 = arith.constant 0 : index
    %9 = vector.load %arg3[%c169, %c0_11] : memref<184x128xf32, #tpu.memory_space<vmem>>, vector<1x128xf32>
    %c170 = arith.constant 170 : index
    %c0_12 = arith.constant 0 : index
    %10 = vector.load %arg3[%c170, %c0_12] : memref<184x128xf32, #tpu.memory_space<vmem>>, vector<1x128xf32>
    %c171 = arith.constant 171 : index
    %c0_13 = arith.constant 0 : index
    %11 = vector.load %arg3[%c171, %c0_13] : memref<184x128xf32, #tpu.memory_space<vmem>>, vector<1x128xf32>
    %c172 = arith.constant 172 : index
    %c0_14 = arith.constant 0 : index
    %12 = vector.load %arg3[%c172, %c0_14] : memref<184x128xf32, #tpu.memory_space<vmem>>, vector<1x128xf32>
    %c173 = arith.constant 173 : index
    %c0_15 = arith.constant 0 : index
    %13 = vector.load %arg3[%c173, %c0_15] : memref<184x128xf32, #tpu.memory_space<vmem>>, vector<1x128xf32>
    %c174 = arith.constant 174 : index
    %c0_16 = arith.constant 0 : index
    %14 = vector.load %arg3[%c174, %c0_16] : memref<184x128xf32, #tpu.memory_space<vmem>>, vector<1x128xf32>
    %c175 = arith.constant 175 : index
    %c0_17 = arith.constant 0 : index
    %15 = vector.load %arg3[%c175, %c0_17] : memref<184x128xf32, #tpu.memory_space<vmem>>, vector<1x128xf32>
    %c176 = arith.constant 176 : index
    %c0_18 = arith.constant 0 : index
    %16 = vector.load %arg3[%c176, %c0_18] : memref<184x128xf32, #tpu.memory_space<vmem>>, vector<1x128xf32>
    %cst = arith.constant dense<0.000000e+00> : vector<8x128xf32>
    %17 = tpu.matmul %1, %4, %cst {dimension_numbers = #tpu.dot_dimension_numbers<[1], [0], [0], [1], [0, 0, 1, 1], [], []>} : vector<8x8xf32>, vector<8x128xf32>, vector<8x128xf32> -> vector<8x128xf32>
    %cst_19 = arith.constant dense<0.000000e+00> : vector<8x128xf32>
    %18 = tpu.matmul %3, %5, %cst_19 {dimension_numbers = #tpu.dot_dimension_numbers<[1], [0], [0], [1], [0, 0, 1, 1], [], []>} : vector<8x32xf32>, vector<32x128xf32>, vector<8x128xf32> -> vector<8x128xf32>
    %19 = arith.addf %17, %18 : vector<8x128xf32>
    %20 = vector.broadcast %8 : vector<1x128xf32> to vector<8x128xf32>
    %21 = arith.addf %19, %20 : vector<8x128xf32>
    %cst_20 = arith.constant 0.000000e+00 : f32
    %22 = vector.broadcast %cst_20 : f32 to vector<8x128xf32>
    %23 = arith.maximumf %21, %22 : vector<8x128xf32>
    %cst_21 = arith.constant dense<0.000000e+00> : vector<128xf32>
    %24 = vector.multi_reduction <add>, %23, %cst_21 [0] : vector<8x128xf32> to vector<128xf32>
    %25 = vector.shape_cast %24 : vector<128xf32> to vector<1x128xf32>
    %cst_22 = arith.constant 8.000000e+00 : f32
    %26 = vector.broadcast %cst_22 : f32 to vector<1x128xf32>
    %27 = arith.divf %25, %26 : vector<1x128xf32>
    %28 = vector.broadcast %27 : vector<1x128xf32> to vector<8x128xf32>
    %29 = arith.subf %23, %28 : vector<8x128xf32>
    %30 = arith.mulf %29, %29 : vector<8x128xf32>
    %cst_23 = arith.constant dense<0.000000e+00> : vector<128xf32>
    %31 = vector.multi_reduction <add>, %30, %cst_23 [0] : vector<8x128xf32> to vector<128xf32>
    %32 = vector.shape_cast %31 : vector<128xf32> to vector<1x128xf32>
    %cst_24 = arith.constant 8.000000e+00 : f32
    %33 = vector.broadcast %cst_24 : f32 to vector<1x128xf32>
    %34 = arith.divf %32, %33 : vector<1x128xf32>
    %cst_25 = arith.constant 9.99999974E-6 : f32
    %35 = vector.broadcast %cst_25 : f32 to vector<1x128xf32>
    %36 = arith.addf %34, %35 : vector<1x128xf32>
    %37 = math.sqrt %36 : vector<1x128xf32>
    %cst_26 = arith.constant 1.000000e+00 : f32
    %38 = vector.broadcast %cst_26 : f32 to vector<1x128xf32>
    %39 = arith.divf %38, %37 : vector<1x128xf32>
    %40 = arith.mulf %9, %39 : vector<1x128xf32>
    %41 = vector.broadcast %40 : vector<1x128xf32> to vector<8x128xf32>
    %42 = arith.mulf %29, %41 : vector<8x128xf32>
    %43 = vector.broadcast %10 : vector<1x128xf32> to vector<8x128xf32>
    %44 = arith.addf %42, %43 : vector<8x128xf32>
    %45 = vector.extract_strided_slice %44 {offsets = [0, 0], sizes = [8, 64], strides = [1, 1]} : vector<8x128xf32> to vector<8x64xf32>
    %cst_27 = arith.constant dense<0.000000e+00> : vector<8x128xf32>
    %46 = tpu.matmul %45, %6, %cst_27 {dimension_numbers = #tpu.dot_dimension_numbers<[1], [0], [0], [1], [0, 0, 1, 1], [], []>} : vector<8x64xf32>, vector<64x128xf32>, vector<8x128xf32> -> vector<8x128xf32>
    %47 = vector.broadcast %11 : vector<1x128xf32> to vector<8x128xf32>
    %48 = arith.addf %46, %47 : vector<8x128xf32>
    %cst_28 = arith.constant 0.000000e+00 : f32
    %49 = vector.broadcast %cst_28 : f32 to vector<8x128xf32>
    %50 = arith.maximumf %48, %49 : vector<8x128xf32>
    %cst_29 = arith.constant dense<0.000000e+00> : vector<128xf32>
    %51 = vector.multi_reduction <add>, %50, %cst_29 [0] : vector<8x128xf32> to vector<128xf32>
    %52 = vector.shape_cast %51 : vector<128xf32> to vector<1x128xf32>
    %cst_30 = arith.constant 8.000000e+00 : f32
    %53 = vector.broadcast %cst_30 : f32 to vector<1x128xf32>
    %54 = arith.divf %52, %53 : vector<1x128xf32>
    %55 = vector.broadcast %54 : vector<1x128xf32> to vector<8x128xf32>
    %56 = arith.subf %50, %55 : vector<8x128xf32>
    %57 = arith.mulf %56, %56 : vector<8x128xf32>
    %cst_31 = arith.constant dense<0.000000e+00> : vector<128xf32>
    %58 = vector.multi_reduction <add>, %57, %cst_31 [0] : vector<8x128xf32> to vector<128xf32>
    %59 = vector.shape_cast %58 : vector<128xf32> to vector<1x128xf32>
    %cst_32 = arith.constant 8.000000e+00 : f32
    %60 = vector.broadcast %cst_32 : f32 to vector<1x128xf32>
    %61 = arith.divf %59, %60 : vector<1x128xf32>
    %cst_33 = arith.constant 9.99999974E-6 : f32
    %62 = vector.broadcast %cst_33 : f32 to vector<1x128xf32>
    %63 = arith.addf %61, %62 : vector<1x128xf32>
    %64 = math.sqrt %63 : vector<1x128xf32>
    %cst_34 = arith.constant 1.000000e+00 : f32
    %65 = vector.broadcast %cst_34 : f32 to vector<1x128xf32>
    %66 = arith.divf %65, %64 : vector<1x128xf32>
    %67 = arith.mulf %12, %66 : vector<1x128xf32>
    %68 = vector.broadcast %67 : vector<1x128xf32> to vector<8x128xf32>
    %69 = arith.mulf %56, %68 : vector<8x128xf32>
    %70 = vector.broadcast %13 : vector<1x128xf32> to vector<8x128xf32>
    %71 = arith.addf %69, %70 : vector<8x128xf32>
    %72 = vector.extract_strided_slice %71 {offsets = [0, 0], sizes = [8, 64], strides = [1, 1]} : vector<8x128xf32> to vector<8x64xf32>
    %cst_35 = arith.constant dense<0.000000e+00> : vector<8x128xf32>
    %73 = tpu.matmul %72, %7, %cst_35 {dimension_numbers = #tpu.dot_dimension_numbers<[1], [0], [0], [1], [0, 0, 1, 1], [], []>} : vector<8x64xf32>, vector<64x128xf32>, vector<8x128xf32> -> vector<8x128xf32>
    %74 = vector.broadcast %14 : vector<1x128xf32> to vector<8x128xf32>
    %75 = arith.addf %73, %74 : vector<8x128xf32>
    %cst_36 = arith.constant 0.000000e+00 : f32
    %76 = vector.broadcast %cst_36 : f32 to vector<8x128xf32>
    %77 = arith.maximumf %75, %76 : vector<8x128xf32>
    %cst_37 = arith.constant dense<0.000000e+00> : vector<128xf32>
    %78 = vector.multi_reduction <add>, %77, %cst_37 [0] : vector<8x128xf32> to vector<128xf32>
    %79 = vector.shape_cast %78 : vector<128xf32> to vector<1x128xf32>
    %cst_38 = arith.constant 8.000000e+00 : f32
    %80 = vector.broadcast %cst_38 : f32 to vector<1x128xf32>
    %81 = arith.divf %79, %80 : vector<1x128xf32>
    %82 = vector.broadcast %81 : vector<1x128xf32> to vector<8x128xf32>
    %83 = arith.subf %77, %82 : vector<8x128xf32>
    %84 = arith.mulf %83, %83 : vector<8x128xf32>
    %cst_39 = arith.constant dense<0.000000e+00> : vector<128xf32>
    %85 = vector.multi_reduction <add>, %84, %cst_39 [0] : vector<8x128xf32> to vector<128xf32>
    %86 = vector.shape_cast %85 : vector<128xf32> to vector<1x128xf32>
    %cst_40 = arith.constant 8.000000e+00 : f32
    %87 = vector.broadcast %cst_40 : f32 to vector<1x128xf32>
    %88 = arith.divf %86, %87 : vector<1x128xf32>
    %cst_41 = arith.constant 9.99999974E-6 : f32
    %89 = vector.broadcast %cst_41 : f32 to vector<1x128xf32>
    %90 = arith.addf %88, %89 : vector<1x128xf32>
    %91 = math.sqrt %90 : vector<1x128xf32>
    %cst_42 = arith.constant 1.000000e+00 : f32
    %92 = vector.broadcast %cst_42 : f32 to vector<1x128xf32>
    %93 = arith.divf %92, %91 : vector<1x128xf32>
    %94 = arith.mulf %15, %93 : vector<1x128xf32>
    %95 = vector.broadcast %94 : vector<1x128xf32> to vector<8x128xf32>
    %96 = arith.mulf %83, %95 : vector<8x128xf32>
    %97 = vector.broadcast %16 : vector<1x128xf32> to vector<8x128xf32>
    %98 = arith.addf %96, %97 : vector<8x128xf32>
    %c0_43 = arith.constant 0 : index
    %c0_44 = arith.constant 0 : index
    %c0_45 = arith.constant 0 : index
    %99 = vector.load %arg4[%c0_43, %c0_44, %c0_45] : memref<1x8x128xf32, #tpu.memory_space<vmem>>, vector<1x8x128xf32>
    %100 = vector.shape_cast %99 : vector<1x8x128xf32> to vector<8x128xf32>
    %101 = vector.shape_cast %98 : vector<8x128xf32> to vector<1x8x128xf32>
    tpu.vector_store %arg4[%c0_43, %c0_44, %c0_45], %101 {strides = array<i32>} : memref<1x8x128xf32, #tpu.memory_space<vmem>>, vector<1x8x128xf32>,
    return
  }
  func.func @transform_0(%arg0: i32) -> (i32, i32, i32) {
    %c0_i32 = arith.constant 0 : i32
    %c0_i32_0 = arith.constant 0 : i32
    %c0_i32_1 = arith.constant 0 : i32
    return %arg0, %c0_i32, %c0_i32_0 : i32, i32, i32
  }
  func.func @transform_1(%arg0: i32) -> (i32, i32, i32) {
    %c0_i32 = arith.constant 0 : i32
    %c0_i32_0 = arith.constant 0 : i32
    %c0_i32_1 = arith.constant 0 : i32
    return %arg0, %c0_i32, %c0_i32_0 : i32, i32, i32
  }
  func.func @transform_2(%arg0: i32) -> (i32, i32) {
    %c0_i32 = arith.constant 0 : i32
    %c0_i32_0 = arith.constant 0 : i32
    %c0_i32_1 = arith.constant 0 : i32
    return %c0_i32, %c0_i32_0 : i32, i32
  }
  func.func @transform_3(%arg0: i32) -> (i32, i32, i32) {
    %c0_i32 = arith.constant 0 : i32
    %c0_i32_0 = arith.constant 0 : i32
    %c0_i32_1 = arith.constant 0 : i32
    return %arg0, %c0_i32, %c0_i32_0 : i32, i32, i32
  }
}

</mosaic_0001>

<llo_original>
// kernel: dyn_model_forward_rollout.1
$region0: #{dyn_model_forward_rollout.1}
  #allocation0 [shape = 'u32[]', space=smem, size = 0x4, offset = 0x4, fixed_abs, tag = 'smem constant byte address 0x4 - core index']
  #allocation1 [shape = 'u32[144,128]{1,0:T(1,128)}', space=vmem, size = 0x12000, scoped, tag = 'internal scratch']
  %s0 = inlined_call_operand.hbm [shape: f32[1,8,8], index: 0, kind: input, shape index: {}]
  %s1 = inlined_call_operand.hbm [shape: f32[1,8,32], index: 1, kind: input, shape index: {}]
  %s2 = inlined_call_operand.hbm [shape: f32[184,128], index: 2, kind: input, shape index: {}]
  %s3 = inlined_call_operand.vmem [shape: f32[1,8,128], index: 3, kind: output, shape index: {}]
  %s4 = sld [smem:[#allocation0]]
  $region34: #{dyn_model_forward_rollout.1} parent=0
    _
  %s6 = ssub.s32 1, %s4
  %s7 = scalar_select 0, %s6, %s4
  $region1: #{dyn_model_forward_rollout.1} parent=0
    #allocation2 [shape = 'u8[4096]{0}', space=vmem, size = 0x1000, scoped, tag = 'input window, operand 0, single buffered']
    #allocation3 [shape = 's32[1]{0}', space=sflag, size = 0x4, scoped, tag = 'scoped memory for dyn_model_forward_rollout.1']
    #allocation4 [shape = 'u8[4096]{0}', space=vmem, size = 0x1000, scoped, tag = 'input window, operand 1, single buffered']
    #allocation5 [shape = 's32[1]{0}', space=sflag, size = 0x4, scoped, tag = 'scoped memory for dyn_model_forward_rollout.1']
    #allocation6 [shape = 'u8[94208]{0}', space=vmem, size = 0x17000, scoped, tag = 'input window, operand 2, single buffered']
    %8 = vsyncpa [#allocation3], 0
    %9 = vsyncpa [#allocation5], 0
    // Predicated region
    $region2: #{dyn_model_forward_rollout.1} parent=1 // pred_check
      _
    $region3: #{dyn_model_forward_rollout.1} parent=1 // pred_check_branch
      %11 = sbr.rel (0) target = $region5
    $region4: #{dyn_model_forward_rollout.1} parent=1 // pred_region
      %s13 = ssub.s32 128, 128
      %14 = vsyncadd [#allocation3], %s13
      %s16 = sshll.u32 [#allocation2], 4
      %s17 = int_to_ptr.vmem [resolvable:$true] %s16
      %19 = dma.hbm_to_vmem [thread:$0]  %s0, 128, %s17, [#allocation3]
    $region5: #{dyn_model_forward_rollout.1} parent=1 // pred_fallthru
      _
    // Predicated region
    $region6: #{dyn_model_forward_rollout.1} parent=1 // pred_check
      _
    $region7: #{dyn_model_forward_rollout.1} parent=1 // pred_check_branch
      %21 = sbr.rel (0) target = $region9
    $region8: #{dyn_model_forward_rollout.1} parent=1 // pred_region
      %s23 = ssub.s32 128, 128
      %24 = vsyncadd [#allocation5], %s23
      %s26 = sshll.u32 [#allocation4], 4
      %s27 = int_to_ptr.vmem [resolvable:$true] %s26
      %29 = dma.hbm_to_vmem [thread:$0]  %s1, 128, %s27, [#allocation5]
    $region9: #{dyn_model_forward_rollout.1} parent=1 // pred_fallthru
      _
    // Predicated region
    $region10: #{dyn_model_forward_rollout.1} parent=1 // pred_check
      _
    $region11: #{dyn_model_forward_rollout.1} parent=1 // pred_check_branch
      %31 = sbr.rel (0) target = $region13
    $region12: #{dyn_model_forward_rollout.1} parent=1 // pred_region
      %s33 = ssub.s32 2944, 2944
      %34 = vsyncadd [#allocation5], %s33
      %s35 = sshll.u32 [#allocation6], 4
      %s36 = int_to_ptr.vmem [resolvable:$true] %s35
      %41 = dma.hbm_to_vmem [thread:$0]  %s2, 2944, %s36, [#allocation5], 128, 128, 8
    $region13: #{dyn_model_forward_rollout.1} parent=1 // pred_fallthru
      _
    // Predicated region
    $region14: #{dyn_model_forward_rollout.1} parent=1 // pred_check
      _
    $region15: #{dyn_model_forward_rollout.1} parent=1 // pred_check_branch
      %43 = sbr.rel (0) target = $region17
    $region16: #{dyn_model_forward_rollout.1} parent=1 // pred_region
      %44 = dma.done [#allocation3], 128
    $region17: #{dyn_model_forward_rollout.1} parent=1 // pred_fallthru
      _
    // Predicated region
    $region18: #{dyn_model_forward_rollout.1} parent=1 // pred_check
      _
    $region19: #{dyn_model_forward_rollout.1} parent=1 // pred_check_branch
      %46 = sbr.rel (0) target = $region21
    $region20: #{dyn_model_forward_rollout.1} parent=1 // pred_region
      %47 = dma.done [#allocation5], 128
    $region21: #{dyn_model_forward_rollout.1} parent=1 // pred_fallthru
      _
    // Predicated region
    $region22: #{dyn_model_forward_rollout.1} parent=1 // pred_check
      _
    $region23: #{dyn_model_forward_rollout.1} parent=1 // pred_check_branch
      %49 = sbr.rel (0) target = $region25
    $region24: #{dyn_model_forward_rollout.1} parent=1 // pred_region
      %50 = dma.done [#allocation5], 2944
    $region25: #{dyn_model_forward_rollout.1} parent=1 // pred_fallthru
      _
    %v51 = vld [vmem:[#allocation2] sm:$0xff]
    %v52 = vld [vmem:[#allocation4] sm:$0xff]
    %v53 = vld [vmem:[#allocation6] sm:$0xff]
    %v54 = vld [vmem:[#allocation6 + $0x8] sm:$0xff]
    %v55 = vld [vmem:[#allocation6 + $0x10] sm:$0xff]
    %v56 = vld [vmem:[#allocation6 + $0x18] sm:$0xff]
    %v57 = vld [vmem:[#allocation6 + $0x20] sm:$0xff]
    %v58 = vld [vmem:[#allocation6 + $0x28] sm:$0xff]
    %v59 = vld [vmem:[#allocation6 + $0x30] sm:$0xff]
    %v60 = vld [vmem:[#allocation6 + $0x38] sm:$0xff]
    %v61 = vld [vmem:[#allocation6 + $0x40] sm:$0xff]
    %v62 = vld [vmem:[#allocation6 + $0x48] sm:$0xff]
    %v63 = vld [vmem:[#allocation6 + $0x50] sm:$0xff]
    %v64 = vld [vmem:[#allocation6 + $0x58] sm:$0xff]
    %v65 = vld [vmem:[#allocation6 + $0x60] sm:$0xff]
    %v66 = vld [vmem:[#allocation6 + $0x68] sm:$0xff]
    %v67 = vld [vmem:[#allocation6 + $0x70] sm:$0xff]
    %v68 = vld [vmem:[#allocation6 + $0x78] sm:$0xff]
    %v69 = vld [vmem:[#allocation6 + $0x80] sm:$0xff]
    %v70 = vld [vmem:[#allocation6 + $0x88] sm:$0xff]
    %v71 = vld [vmem:[#allocation6 + $0x90] sm:$0xff]
    %v72 = vld [vmem:[#allocation6 + $0x98] sm:$0xff]
    %v73 = vld [vmem:[#allocation6 + $0xa0] sm:$0xff]
    %v74 = vld [vmem:[#allocation6 + $0xa8] sm:$0x1]
    %v75 = vld [vmem:[#allocation6 + $0xa9] sm:$0x1]
    %v76 = vld [vmem:[#allocation6 + $0xaa] sm:$0x1]
    %v77 = vld [vmem:[#allocation6 + $0xab] sm:$0x1]
    %v78 = vld [vmem:[#allocation6 + $0xac] sm:$0x1]
    %v79 = vld [vmem:[#allocation6 + $0xad] sm:$0x1]
    %v80 = vld [vmem:[#allocation6 + $0xae] sm:$0x1]
    %v81 = vld [vmem:[#allocation6 + $0xaf] sm:$0x1]
    %v82 = vld [vmem:[#allocation6 + $0xb0] sm:$0x1]
    %vm83 = vcmask 261120
    %v85 = vsel %vm83, %v52, 0
    %87 = vmatprep.subr.mxu0 0.0
    %88 = vmatpush1.msra.mxu0 %v54
    %89 = vmatprep.subr.mxu0 0.0
    %90 = vmatpush1.msra.mxu0 %v55
    %91 = vmatprep.subr.mxu0 0.0
    %92 = vmatpush1.msra.mxu0 %v56
    %93 = vmatprep.subr.mxu0 0.0
    %94 = vmatpush1.msra.mxu0 %v57
    %95 = vmatprep.subr.mxu0 0.0
    %96 = vmatpush1.msra.mxu0 0.0
    %97 = vmatprep.subr.mxu0 0.0
    %98 = vmatpush1.msra.mxu0 0.0
    %99 = vmatprep.subr.mxu0 0.0
    %100 = vmatpush1.msra.mxu0 0.0
    %101 = vmatprep.subr.mxu0 0.0
    %102 = vmatpush1.msra.mxu0 0.0
    %103 = vmatprep.subr.mxu0 0.0
    %104 = vmatpush1.msra.mxu0 0.0
    %105 = vmatprep.subr.mxu0 0.0
    %106 = vmatpush1.msra.mxu0 0.0
    %107 = vmatprep.subr.mxu0 0.0
    %108 = vmatpush1.msra.mxu0 0.0
    %109 = vmatprep.subr.mxu0 0.0
    %110 = vmatpush1.msra.mxu0 0.0
    %111 = vmatprep.subr.mxu0 0.0
    %112 = vmatpush1.msra.mxu0 0.0
    %113 = vmatprep.subr.mxu0 0.0
    %114 = vmatpush1.msra.mxu0 0.0
    %115 = vmatprep.subr.mxu0 0.0
    %116 = vmatpush1.msra.mxu0 0.0
    %117 = vmatprep.subr.mxu0 0.0
    %118 = vmatpush1.msra.mxu0 0.0
    %119 = vmatprep.subr.mxu0 0.0
    %120 = vmatpush1.msra.mxu0 0.0
    %121 = vmatprep.subr.mxu0 0.0
    %122 = vmatpush1.msra.mxu0 0.0
    %123 = vmatprep.subr.mxu0 0.0
    %124 = vmatpush1.msra.mxu0 0.0
    %125 = vmatprep.subr.mxu0 0.0
    %126 = vmatpush1.msra.mxu0 0.0
    %127 = vmatprep.subr.mxu0 0.0
    %128 = vmatpush1.msra.mxu0 0.0
    %129 = vmatprep.subr.mxu0 0.0
    %130 = vmatpush1.msra.mxu0 0.0
    %131 = vmatprep.subr.mxu0 0.0
    %132 = vmatpush1.msra.mxu0 0.0
    %133 = vmatprep.subr.mxu0 0.0
    %134 = vmatpush1.msra.mxu0 0.0
    %135 = vmatprep.subr.mxu0 0.0
    %136 = vmatpush1.msra.mxu0 0.0
    %137 = vmatprep.subr.mxu0 0.0
    %138 = vmatpush1.msra.mxu0 0.0
    %139 = vmatprep.subr.mxu0 0.0
    %140 = vmatpush1.msra.mxu0 0.0
    %141 = vmatprep.subr.mxu0 0.0
    %142 = vmatpush1.msra.mxu0 0.0
    %143 = vmatprep.subr.mxu0 0.0
    %144 = vmatpush1.msra.mxu0 0.0
    %145 = vmatprep.subr.mxu0 0.0
    %146 = vmatpush1.msra.mxu0 0.0
    %147 = vmatprep.subr.mxu0 0.0
    %148 = vmatpush1.msra.mxu0 0.0
    %149 = vmatprep.subr.mxu0 0.0
    %150 = vmatpush1.msra.mxu0 0.0
    %151 = vmatprep.mubr.f32.mxu0 0.0
    %152 = vmatmul.mubr.f32.gmra.mrb[0].mxu0 %v85
    %v153 = vpop.f32.mrb[0].mxu0
    %v154 = vadd.f32 0.0, %v153
    %v155 = vpop.f32.mrb[0].mxu0
    %156 = vdwg.mxu0
    %vm157 = vcmask 64512
    %v159 = vsel %vm157, %v51, 0
    %161 = vmatprep.subr.mxu0 0.0
    %162 = vmatpush1.msra.mxu0 %v53
    %163 = vmatprep.subr.mxu0 0.0
    %164 = vmatpush1.msra.mxu0 0.0
    %165 = vmatprep.subr.mxu0 0.0
    %166 = vmatpush1.msra.mxu0 0.0
    %167 = vmatprep.subr.mxu0 0.0
    %168 = vmatpush1.msra.mxu0 0.0
    %169 = vmatprep.subr.mxu0 0.0
    %170 = vmatpush1.msra.mxu0 0.0
    %171 = vmatprep.subr.mxu0 0.0
    %172 = vmatpush1.msra.mxu0 0.0
    %173 = vmatprep.subr.mxu0 0.0
    %174 = vmatpush1.msra.mxu0 0.0
    %175 = vmatprep.subr.mxu0 0.0
    %176 = vmatpush1.msra.mxu0 0.0
    %177 = vmatprep.subr.mxu0 0.0
    %178 = vmatpush1.msra.mxu0 0.0
    %179 = vmatprep.subr.mxu0 0.0
    %180 = vmatpush1.msra.mxu0 0.0
    %181 = vmatprep.subr.mxu0 0.0
    %182 = vmatpush1.msra.mxu0 0.0
    %183 = vmatprep.subr.mxu0 0.0
    %184 = vmatpush1.msra.mxu0 0.0
    %185 = vmatprep.subr.mxu0 0.0
    %186 = vmatpush1.msra.mxu0 0.0
    %187 = vmatprep.subr.mxu0 0.0
    %188 = vmatpush1.msra.mxu0 0.0
    %189 = vmatprep.subr.mxu0 0.0
    %190 = vmatpush1.msra.mxu0 0.0
    %191 = vmatprep.subr.mxu0 0.0
    %192 = vmatpush1.msra.mxu0 0.0
    %193 = vmatprep.subr.mxu0 0.0
    %194 = vmatpush1.msra.mxu0 0.0
    %195 = vmatprep.subr.mxu0 0.0
    %196 = vmatpush1.msra.mxu0 0.0
    %197 = vmatprep.subr.mxu0 0.0
    %198 = vmatpush1.msra.mxu0 0.0
    %199 = vmatprep.subr.mxu0 0.0
    %200 = vmatpush1.msra.mxu0 0.0
    %201 = vmatprep.subr.mxu0 0.0
    %202 = vmatpush1.msra.mxu0 0.0
    %203 = vmatprep.subr.mxu0 0.0
    %204 = vmatpush1.msra.mxu0 0.0
    %205 = vmatprep.subr.mxu0 0.0
    %206 = vmatpush1.msra.mxu0 0.0
    %207 = vmatprep.subr.mxu0 0.0
    %208 = vmatpush1.msra.mxu0 0.0
    %209 = vmatprep.subr.mxu0 0.0
    %210 = vmatpush1.msra.mxu0 0.0
    %211 = vmatprep.subr.mxu0 0.0
    %212 = vmatpush1.msra.mxu0 0.0
    %213 = vmatprep.subr.mxu0 0.0
    %214 = vmatpush1.msra.mxu0 0.0
    %215 = vmatprep.subr.mxu0 0.0
    %216 = vmatpush1.msra.mxu0 0.0
    %217 = vmatprep.subr.mxu0 0.0
    %218 = vmatpush1.msra.mxu0 0.0
    %219 = vmatprep.subr.mxu0 0.0
    %220 = vmatpush1.msra.mxu0 0.0
    %221 = vmatprep.subr.mxu0 0.0
    %222 = vmatpush1.msra.mxu0 0.0
    %223 = vmatprep.subr.mxu0 0.0
    %224 = vmatpush1.msra.mxu0 0.0
    %225 = vmatprep.mubr.f32.mxu0 0.0
    %226 = vmatmul.mubr.f32.gmra.mrb[0].mxu0 %v159
    %v227 = vpop.f32.mrb[0].mxu0
    %v228 = vadd.f32 %v154, %v227
    %v229 = vpop.f32.mrb[0].mxu0
    %230 = vdwg.mxu0
    %v231 = vlaneseq
    %v232 = vshrl.u32 %v231, 7
    %v233 = vsub.s32 0, %v232
    %v234 = vrot.slane %v74, %v233
    %v235 = vadd.f32 %v228, %v234
    %v236 = vmax.f32 %v235, 0.0
    %v237 = vrot.slane %v236, 4
    %v238 = vadd.f32 %v236, %v237
    %v239 = vrot.slane %v238, 2
    %v240 = vadd.f32 %v238, %v239
    %v241 = vrot.slane %v240, 1
    %v242 = vadd.f32 %v240, %v241
    %v243 = vrcp.pop 8.0
    %v244 = vmul.f32 %v242, %v243
    %v245 = vsub.f32 %v236, %v244
    %v246 = vmul.f32 %v245, %v245
    %v247 = vrot.slane %v246, 4
    %v248 = vadd.f32 %v246, %v247
    %v249 = vrot.slane %v248, 2
    %v250 = vadd.f32 %v248, %v249
    %v251 = vrot.slane %v250, 1
    %v252 = vadd.f32 %v250, %v251
    %v253 = vmul.f32 %v252, %v243
    %v254 = vadd.f32 %v253, 1e-05
    %v255 = vrsqrt.pop %v254
    %v256 = vmul.f32 %v254, %v255
    %vm257 = vcmp.eq.f32.partialorder %v254, inf
    %v258 = vsel %vm257, %v254, %v256
    %vm259 = vcmp.eq.f32.partialorder %v254, 0.0
    %v260 = vand.u32 %v254, 2147483648
    %v261 = vsel %vm259, %v260, %v258
    %v262 = vrcp.pop %v261
    %v263 = vmul.f32 1.0, %v262
    %v264 = vmul.f32 %v75, %v263
    %v265 = vlaneseq
    %v266 = vshrl.u32 %v265, 7
    %v267 = vsub.s32 0, %v266
    %v268 = vrot.slane %v264, %v267
    %v269 = vmul.f32 %v245, %v268
    %v270 = vlaneseq
    %v271 = vshrl.u32 %v270, 7
    %v272 = vsub.s32 0, %v271
    %v273 = vrot.slane %v76, %v272
    %v274 = vadd.f32 %v269, %v273
    %v275 = vlaneseq
    %v276 = vshrl.u32 %v275, 7
    %v277 = vsub.s32 0, %v276
    %v278 = vrot.slane %v77, %v277
    %vm279 = vcmask 523264
    %v281 = vsel %vm279, %v274, 0
    %283 = vmatprep.subr.mxu0 0.0
    %284 = vmatpush1.msra.mxu0 %v58
    %285 = vmatprep.subr.mxu0 0.0
    %286 = vmatpush1.msra.mxu0 %v59
    %287 = vmatprep.subr.mxu0 0.0
    %288 = vmatpush1.msra.mxu0 %v60
    %289 = vmatprep.subr.mxu0 0.0
    %290 = vmatpush1.msra.mxu0 %v61
    %291 = vmatprep.subr.mxu0 0.0
    %292 = vmatpush1.msra.mxu0 %v62
    %293 = vmatprep.subr.mxu0 0.0
    %294 = vmatpush1.msra.mxu0 %v63
    %295 = vmatprep.subr.mxu0 0.0
    %296 = vmatpush1.msra.mxu0 %v64
    %297 = vmatprep.subr.mxu0 0.0
    %298 = vmatpush1.msra.mxu0 %v65
    %299 = vmatprep.subr.mxu0 0.0
    %300 = vmatpush1.msra.mxu0 0.0
    %301 = vmatprep.subr.mxu0 0.0
    %302 = vmatpush1.msra.mxu0 0.0
    %303 = vmatprep.subr.mxu0 0.0
    %304 = vmatpush1.msra.mxu0 0.0
    %305 = vmatprep.subr.mxu0 0.0
    %306 = vmatpush1.msra.mxu0 0.0
    %307 = vmatprep.subr.mxu0 0.0
    %308 = vmatpush1.msra.mxu0 0.0
    %309 = vmatprep.subr.mxu0 0.0
    %310 = vmatpush1.msra.mxu0 0.0
    %311 = vmatprep.subr.mxu0 0.0
    %312 = vmatpush1.msra.mxu0 0.0
    %313 = vmatprep.subr.mxu0 0.0
    %314 = vmatpush1.msra.mxu0 0.0
    %315 = vmatprep.subr.mxu0 0.0
    %316 = vmatpush1.msra.mxu0 0.0
    %317 = vmatprep.subr.mxu0 0.0
    %318 = vmatpush1.msra.mxu0 0.0
    %319 = vmatprep.subr.mxu0 0.0
    %320 = vmatpush1.msra.mxu0 0.0
    %321 = vmatprep.subr.mxu0 0.0
    %322 = vmatpush1.msra.mxu0 0.0
    %323 = vmatprep.subr.mxu0 0.0
    %324 = vmatpush1.msra.mxu0 0.0
    %325 = vmatprep.subr.mxu0 0.0
    %326 = vmatpush1.msra.mxu0 0.0
    %327 = vmatprep.subr.mxu0 0.0
    %328 = vmatpush1.msra.mxu0 0.0
    %329 = vmatprep.subr.mxu0 0.0
    %330 = vmatpush1.msra.mxu0 0.0
    %331 = vmatprep.subr.mxu0 0.0
    %332 = vmatpush1.msra.mxu0 0.0
    %333 = vmatprep.subr.mxu0 0.0
    %334 = vmatpush1.msra.mxu0 0.0
    %335 = vmatprep.subr.mxu0 0.0
    %336 = vmatpush1.msra.mxu0 0.0
    %337 = vmatprep.subr.mxu0 0.0
    %338 = vmatpush1.msra.mxu0 0.0
    %339 = vmatprep.subr.mxu0 0.0
    %340 = vmatpush1.msra.mxu0 0.0
    %341 = vmatprep.subr.mxu0 0.0
    %342 = vmatpush1.msra.mxu0 0.0
    %343 = vmatprep.subr.mxu0 0.0
    %344 = vmatpush1.msra.mxu0 0.0
    %345 = vmatprep.subr.mxu0 0.0
    %346 = vmatpush1.msra.mxu0 0.0
    %347 = vmatprep.mubr.f32.mxu0 0.0
    %348 = vmatmul.mubr.f32.gmra.mrb[0].mxu0 %v281
    %v349 = vpop.f32.mrb[0].mxu0
    %v350 = vadd.f32 %v278, %v349
    %v351 = vpop.f32.mrb[0].mxu0
    %352 = vdwg.mxu0
    %v353 = vmax.f32 %v350, 0.0
    %v354 = vrot.slane %v353, 4
    %v355 = vadd.f32 %v353, %v354
    %v356 = vrot.slane %v355, 2
    %v357 = vadd.f32 %v355, %v356
    %v358 = vrot.slane %v357, 1
    %v359 = vadd.f32 %v357, %v358
    %v360 = vmul.f32 %v359, %v243
    %v361 = vsub.f32 %v353, %v360
    %v362 = vmul.f32 %v361, %v361
    %v363 = vrot.slane %v362, 4
    %v364 = vadd.f32 %v362, %v363
    %v365 = vrot.slane %v364, 2
    %v366 = vadd.f32 %v364, %v365
    %v367 = vrot.slane %v366, 1
    %v368 = vadd.f32 %v366, %v367
    %v369 = vmul.f32 %v368, %v243
    %v370 = vadd.f32 %v369, 1e-05
    %v371 = vrsqrt.pop %v370
    %v372 = vmul.f32 %v370, %v371
    %vm373 = vcmp.eq.f32.partialorder %v370, inf
    %v374 = vsel %vm373, %v370, %v372
    %vm375 = vcmp.eq.f32.partialorder %v370, 0.0
    %v376 = vand.u32 %v370, 2147483648
    %v377 = vsel %vm375, %v376, %v374
    %v378 = vrcp.pop %v377
    %v379 = vmul.f32 1.0, %v378
    %v380 = vmul.f32 %v78, %v379
    %v381 = vlaneseq
    %v382 = vshrl.u32 %v381, 7
    %v383 = vsub.s32 0, %v382
    %v384 = vrot.slane %v380, %v383
    %v385 = vmul.f32 %v361, %v384
    %v386 = vlaneseq
    %v387 = vshrl.u32 %v386, 7
    %v388 = vsub.s32 0, %v387
    %v389 = vrot.slane %v79, %v388
    %v390 = vadd.f32 %v385, %v389
    %v391 = vlaneseq
    %v392 = vshrl.u32 %v391, 7
    %v393 = vsub.s32 0, %v392
    %v394 = vrot.slane %v80, %v393
    %v396 = vsel %vm279, %v390, 0
    %398 = vmatprep.subr.mxu0 0.0
    %399 = vmatpush1.msra.mxu0 %v66
    %400 = vmatprep.subr.mxu0 0.0
    %401 = vmatpush1.msra.mxu0 %v67
    %402 = vmatprep.subr.mxu0 0.0
    %403 = vmatpush1.msra.mxu0 %v68
    %404 = vmatprep.subr.mxu0 0.0
    %405 = vmatpush1.msra.mxu0 %v69
    %406 = vmatprep.subr.mxu0 0.0
    %407 = vmatpush1.msra.mxu0 %v70
    %408 = vmatprep.subr.mxu0 0.0
    %409 = vmatpush1.msra.mxu0 %v71
    %410 = vmatprep.subr.mxu0 0.0
    %411 = vmatpush1.msra.mxu0 %v72
    %412 = vmatprep.subr.mxu0 0.0
    %413 = vmatpush1.msra.mxu0 %v73
    %414 = vmatprep.subr.mxu0 0.0
    %415 = vmatpush1.msra.mxu0 0.0
    %416 = vmatprep.subr.mxu0 0.0
    %417 = vmatpush1.msra.mxu0 0.0
    %418 = vmatprep.subr.mxu0 0.0
    %419 = vmatpush1.msra.mxu0 0.0
    %420 = vmatprep.subr.mxu0 0.0
    %421 = vmatpush1.msra.mxu0 0.0
    %422 = vmatprep.subr.mxu0 0.0
    %423 = vmatpush1.msra.mxu0 0.0
    %424 = vmatprep.subr.mxu0 0.0
    %425 = vmatpush1.msra.mxu0 0.0
    %426 = vmatprep.subr.mxu0 0.0
    %427 = vmatpush1.msra.mxu0 0.0
    %428 = vmatprep.subr.mxu0 0.0
    %429 = vmatpush1.msra.mxu0 0.0
    %430 = vmatprep.subr.mxu0 0.0
    %431 = vmatpush1.msra.mxu0 0.0
    %432 = vmatprep.subr.mxu0 0.0
    %433 = vmatpush1.msra.mxu0 0.0
    %434 = vmatprep.subr.mxu0 0.0
    %435 = vmatpush1.msra.mxu0 0.0
    %436 = vmatprep.subr.mxu0 0.0
    %437 = vmatpush1.msra.mxu0 0.0
    %438 = vmatprep.subr.mxu0 0.0
    %439 = vmatpush1.msra.mxu0 0.0
    %440 = vmatprep.subr.mxu0 0.0
    %441 = vmatpush1.msra.mxu0 0.0
    %442 = vmatprep.subr.mxu0 0.0
    %443 = vmatpush1.msra.mxu0 0.0
    %444 = vmatprep.subr.mxu0 0.0
    %445 = vmatpush1.msra.mxu0 0.0
    %446 = vmatprep.subr.mxu0 0.0
    %447 = vmatpush1.msra.mxu0 0.0
    %448 = vmatprep.subr.mxu0 0.0
    %449 = vmatpush1.msra.mxu0 0.0
    %450 = vmatprep.subr.mxu0 0.0
    %451 = vmatpush1.msra.mxu0 0.0
    %452 = vmatprep.subr.mxu0 0.0
    %453 = vmatpush1.msra.mxu0 0.0
    %454 = vmatprep.subr.mxu0 0.0
    %455 = vmatpush1.msra.mxu0 0.0
    %456 = vmatprep.subr.mxu0 0.0
    %457 = vmatpush1.msra.mxu0 0.0
    %458 = vmatprep.subr.mxu0 0.0
    %459 = vmatpush1.msra.mxu0 0.0
    %460 = vmatprep.subr.mxu0 0.0
    %461 = vmatpush1.msra.mxu0 0.0
    %462 = vmatprep.mubr.f32.mxu0 0.0
    %463 = vmatmul.mubr.f32.gmra.mrb[0].mxu0 %v396
    %v464 = vpop.f32.mrb[0].mxu0
    %v465 = vadd.f32 %v394, %v464
    %v466 = vpop.f32.mrb[0].mxu0
    %467 = vdwg.mxu0
    %v468 = vmax.f32 %v465, 0.0
    %v469 = vrot.slane %v468, 4
    %v470 = vadd.f32 %v468, %v469
    %v471 = vrot.slane %v470, 2
    %v472 = vadd.f32 %v470, %v471
    %v473 = vrot.slane %v472, 1
    %v474 = vadd.f32 %v472, %v473
    %v475 = vmul.f32 %v474, %v243
    %v476 = vsub.f32 %v468, %v475
    %v477 = vmul.f32 %v476, %v476
    %v478 = vrot.slane %v477, 4
    %v479 = vadd.f32 %v477, %v478
    %v480 = vrot.slane %v479, 2
    %v481 = vadd.f32 %v479, %v480
    %v482 = vrot.slane %v481, 1
    %v483 = vadd.f32 %v481, %v482
    %v484 = vmul.f32 %v483, %v243
    %v485 = vadd.f32 %v484, 1e-05
    %v486 = vrsqrt.pop %v485
    %v487 = vmul.f32 %v485, %v486
    %vm488 = vcmp.eq.f32.partialorder %v485, inf
    %v489 = vsel %vm488, %v485, %v487
    %vm490 = vcmp.eq.f32.partialorder %v485, 0.0
    %v491 = vand.u32 %v485, 2147483648
    %v492 = vsel %vm490, %v491, %v489
    %v493 = vrcp.pop %v492
    %v494 = vmul.f32 1.0, %v493
    %v495 = vmul.f32 %v81, %v494
    %v496 = vlaneseq
    %v497 = vshrl.u32 %v496, 7
    %v498 = vsub.s32 0, %v497
    %v499 = vrot.slane %v495, %v498
    %v500 = vmul.f32 %v476, %v499
    %v501 = vlaneseq
    %v502 = vshrl.u32 %v501, 7
    %v503 = vsub.s32 0, %v502
    %v504 = vrot.slane %v82, %v503
    %v505 = vadd.f32 %v500, %v504
    %506 = vst [vmem:[%s3] sm:$0xff] %v505
    // Predicated region
    $region26: #{dyn_model_forward_rollout.1} parent=1 // pred_check
      _
    $region27: #{dyn_model_forward_rollout.1} parent=1 // pred_check_branch
      %508 = sbr.rel (0) target = $region29
    $region28: #{dyn_model_forward_rollout.1} parent=1 // pred_region
      _
    $region29: #{dyn_model_forward_rollout.1} parent=1 // pred_fallthru
      _
    // Predicated region
    $region30: #{dyn_model_forward_rollout.1} parent=1 // pred_check
      _
    $region31: #{dyn_model_forward_rollout.1} parent=1 // pred_check_branch
      %510 = sbr.rel (0) target = $region33
    $region32: #{dyn_model_forward_rollout.1} parent=1 // pred_region
      _
    $region33: #{dyn_model_forward_rollout.1} parent=1 // pred_fallthru
      _
    %511 = vsyncpa [#allocation3], 1
    %512 = vsyncpa [#allocation5], 1

</llo_original>
